<compile_context>
chip_gen: v6e
topology: v6e:2x2x1
jax: 0.10.0
libtpu: 0.0.40
codegen_flags: <defaults>
</compile_context>

<pallas_src>
import functools

import numpy as np
import jax
import jax.numpy as jnp
from jax.experimental import pallas as pl
from jax.experimental.pallas import tpu as pltpu

_VMEM_LIMIT_BYTES = 32 * 1024 * 1024  # fits the v7x 64 MiB VMEM comfortably


def _cparams(*sem):
    return pltpu.CompilerParams(dimension_semantics=sem,
                                vmem_limit_bytes=_VMEM_LIMIT_BYTES)


def _pick_rows_tile(m, target=1024):
    """Row-tile size: big enough to amortize per-step overhead, v7x-safe."""
    if m <= target:
        return m
    return max(8, (target // 8) * 8)


# ----------------------------- Pallas kernels -----------------------------

def _seg_backbone_kernel(x_ref, w1_ref, b1_ref, w2_ref, b2_ref, o_ref):
    """Fused synthetic backbone: (x @ w1 + b1).relu() @ w2 + b2, one tile."""
    x = x_ref[...]                                     # (T, CIN) f32
    t_rows, cin = x_ref.shape
    if cin <= 8:
        # K is tiny (e.g. 3): do the contraction on the VPU as CIN FMAs
        # instead of wasting a 128-deep MXU pass (matters most on v5e).
        h = jnp.broadcast_to(b1_ref[...], (t_rows, b1_ref.shape[1]))
        for k in range(cin):
            h = h + x[:, k:k + 1] * w1_ref[k:k + 1, :]
    else:
        h = jnp.dot(x.astype(jnp.bfloat16), w1_ref[...].astype(jnp.bfloat16),
                    preferred_element_type=jnp.float32) + b1_ref[...]
    h = jnp.maximum(h, 0.0)                            # ReLU; stays in VMEM
    o_ref[...] = jnp.dot(h.astype(jnp.bfloat16), w2_ref[...],
                         preferred_element_type=jnp.float32) + b2_ref[...]


def _resize_kernel(x_ref, ah_ref, awc_ref, o_ref):
    """Fused bilinear (align_corners=True) resize for one batch item.

    x_ref : (1, h, w*C) logits, ah: (H, h), awc: (w*C, W*C) = kron(aw.T, I_C).
    Output (1, H, W*C) is lane-dense (last dim a multiple of 128 when W*C is).
    """
    t = jnp.dot(ah_ref[...], x_ref[0], preferred_element_type=jnp.float32)
    o_ref[0] = jnp.dot(t, awc_ref[...], preferred_element_type=jnp.float32)


def _loss_kernel(logits_ref, lbl_ref, dw1_ref, db1_ref, dw2_ref, db2_ref,
                 ce_ref, bce0_ref, bce1_ref, ent_ref,
                 *, num_classes, entropy_input, total_rows):
    """Fused per-domain losses in one pass over the logits.

    softmax / log-softmax is computed once per tile and shared between:
      * cross-entropy vs. int labels (iota compare, no one-hot),
      * entropy_loss(softmax(logits)),
      * discriminator branch (prob_2_entropy or softmax -> 1x1 conv ->
        LeakyReLU -> 1x1 conv) followed by BCE-with-logits against 0 and 1.
    Grid is (domain, row_tiles); all intermediates stay in VMEM; only four
    (1,1,1) scalar accumulators per domain are emitted.
    """
    i = pl.program_id(1)

    @pl.when(i == 0)
    def _():
        ce_ref[...] = jnp.zeros_like(ce_ref)
        bce0_ref[...] = jnp.zeros_like(bce0_ref)
        bce1_ref[...] = jnp.zeros_like(bce1_ref)
        ent_ref[...] = jnp.zeros_like(ent_ref)

    x = logits_ref[0]                                    # (T, C) f32
    t = x.shape[0]
    row = jax.lax.broadcasted_iota(jnp.int32, (t, 1), 0) + i * t
    valid = row < total_rows                             # (T, 1) mask padding

    # shared softmax / log-softmax (exp on EUP, divide via approx reciprocal)
    xm = x - jnp.max(x, axis=-1, keepdims=True)
    e = jnp.exp(xm)
    se = jnp.sum(e, axis=-1, keepdims=True)
    p = e * pl.reciprocal(se, approx=True)               # probs
    logp = xm - jnp.log(se)                              # log-softmax

    # cross-entropy against int32 labels (no one-hot materialization)
    lbl = lbl_ref[0]                                     # (T, 1) int32
    cls = jax.lax.broadcasted_iota(jnp.int32, logp.shape, 1)
    picked = jnp.sum(jnp.where(cls == lbl, logp, 0.0), axis=-1, keepdims=True)
    ce_ref[...] += -jnp.sum(jnp.where(valid, picked, 0.0), keepdims=True)

    # entropy_loss(softmax(logits)) numerator (reuses p)
    neg_p_log2p = -p * jnp.log2(p + 1e-30)               # (T, C)
    ent_ref[...] += jnp.sum(jnp.where(valid, neg_p_log2p, 0.0), keepdims=True)

    # discriminator preprocess
    if entropy_input:
        feat = neg_p_log2p * np.float32(1.0 / np.log2(num_classes))
    else:
        feat = p

    # TODO(synk): real build_discriminator() is external; substituted with a
    # 1x1 conv -> LeakyReLU(0.2) -> 1x1 conv (1 channel); confirm slope.
    h = jnp.dot(feat.astype(jnp.bfloat16), dw1_ref[...],
                preferred_element_type=jnp.float32) + db1_ref[...]
    h = jnp.where(h >= 0.0, h, 0.2 * h)
    # width-1 output conv done as VPU mul + lane reduce (never stored to HBM)
    d = jnp.sum(h * dw2_ref[...], axis=-1, keepdims=True) + db2_ref[...]

    # BCEWithLogits against constant targets 0 and 1 (mean reduction later)
    sp = jnp.maximum(d, 0.0) + jnp.log(1.0 + jnp.exp(-jnp.abs(d)))
    bce0_ref[...] += jnp.sum(jnp.where(valid, sp, 0.0), keepdims=True)
    bce1_ref[...] += jnp.sum(jnp.where(valid, sp - d, 0.0), keepdims=True)

    @pl.when(i == pl.num_programs(1) - 1)
    def _():
        inv = np.float32(1.0 / total_rows)
        ce_ref[...] = ce_ref[...] * inv
        bce0_ref[...] = bce0_ref[...] * inv
        bce1_ref[...] = bce1_ref[...] * inv
        ent_ref[...] = ent_ref[...] * np.float32(
            1.0 / (total_rows * np.log2(num_classes)))


# ----------------------------- wrappers / glue -----------------------------

def seg_backbone(x2d, params, *, row_tile=1024):
    """Fused two-layer 1x1-conv backbone over (M, CIN) rows."""
    m, cin = x2d.shape
    hid = params["w1"].shape[1]
    c = params["w2"].shape[1]
    t = _pick_rows_tile(m, row_tile)
    return pl.pallas_call(
        _seg_backbone_kernel,
        out_shape=jax.ShapeDtypeStruct((m, c), jnp.float32),
        grid=(pl.cdiv(m, t),),
        in_specs=[
            pl.BlockSpec((t, cin), lambda i: (i, 0)),
            pl.BlockSpec((cin, hid), lambda i: (0, 0)),
            pl.BlockSpec((1, hid), lambda i: (0, 0)),
            pl.BlockSpec((hid, c), lambda i: (0, 0)),
            pl.BlockSpec((1, c), lambda i: (0, 0)),
        ],
        out_specs=pl.BlockSpec((t, c), lambda i: (i, 0)),
        compiler_params=_cparams("parallel"),
    )(x2d, params["w1"], params["b1"].reshape(1, -1),
      params["w2"].astype(jnp.bfloat16), params["b2"].reshape(1, -1))


def _interp_matrix(out_size, in_size):
    """Interpolation matrix for bilinear, align_corners=True (static numpy)."""
    if in_size == 1 or out_size == 1:
        m = np.zeros((out_size, in_size), dtype=np.float32)
        m[:, 0] = 1.0
        return m
    pos = np.arange(out_size, dtype=np.float64) * (in_size - 1) / (out_size - 1)
    lo = np.floor(pos).astype(np.int64)
    hi = np.minimum(lo + 1, in_size - 1)
    frac = (pos - lo).astype(np.float32)
    m = np.zeros((out_size, in_size), dtype=np.float32)
    m[np.arange(out_size), lo] += 1.0 - frac
    m[np.arange(out_size), hi] += frac
    return m


@functools.lru_cache(maxsize=None)
def _resize_matrices(out_h, out_w, in_h, in_w, c):
    ah = jnp.asarray(_interp_matrix(out_h, in_h))                     # (H, h)
    aw = _interp_matrix(out_w, in_w)                                  # (W, w)
    # fold the per-channel identity into the width interp so both passes are
    # plain 2D lane-dense matmuls (no in-kernel transposes/reshapes).
    awc = jnp.asarray(np.kron(aw.T, np.eye(c, dtype=np.float32)))     # (w*C, W*C)
    return ah, awc


def bilinear_resize(logits2d, n, in_h, in_w, c, out_h, out_w):
    """(n*in_h*in_w, C) -> (n, out_h, out_w*C), bilinear align_corners=True."""
    # TODO(synk): for large upsample factors replace the kron'd dense width
    # matrix with a 2-tap gather+lerp (interp matrix has only 2 nonzeros/row).
    x = logits2d.reshape(n, in_h, in_w * c)
    ah, awc = _resize_matrices(out_h, out_w, in_h, in_w, c)
    return pl.pallas_call(
        _resize_kernel,
        out_shape=jax.ShapeDtypeStruct((n, out_h, out_w * c), jnp.float32),
        grid=(n,),
        in_specs=[
            pl.BlockSpec((1, in_h, in_w * c), lambda i: (i, 0, 0)),
            pl.BlockSpec((out_h, in_h), lambda i: (0, 0)),
            pl.BlockSpec((in_w * c, out_w * c), lambda i: (0, 0)),
        ],
        out_specs=pl.BlockSpec((1, out_h, out_w * c), lambda i: (i, 0, 0)),
        compiler_params=_cparams("parallel"),
    )(x, ah, awc)


def fused_domain_losses(logits_dm, labels_dm, params, *, num_classes,
                        entropy_input, row_tile=1024):
    """All training losses for every domain in a single pallas_call.

    logits_dm: (D, M, C) f32, labels_dm: (D, M, 1) int32.
    Returns (ce, bce0, bce1, ent), each a length-D vector.
    """
    ndom, m, c = logits_dm.shape
    dh = params["dw1"].shape[1]
    t = _pick_rows_tile(m, row_tile)
    scal = jax.ShapeDtypeStruct((ndom, 1, 1), jnp.float32)
    scal_spec = pl.BlockSpec((1, 1, 1), lambda d, i: (d, 0, 0))
    ce, bce0, bce1, ent = pl.pallas_call(
        functools.partial(_loss_kernel, num_classes=num_classes,
                          entropy_input=entropy_input, total_rows=m),
        out_shape=(scal, scal, scal, scal),
        grid=(ndom, pl.cdiv(m, t)),
        in_specs=[
            pl.BlockSpec((1, t, c), lambda d, i: (d, i, 0)),
            pl.BlockSpec((1, t, 1), lambda d, i: (d, i, 0)),
            pl.BlockSpec((c, dh), lambda d, i: (0, 0)),
            pl.BlockSpec((1, dh), lambda d, i: (0, 0)),
            pl.BlockSpec((1, dh), lambda d, i: (0, 0)),
            pl.BlockSpec((1, 1), lambda d, i: (0, 0)),
        ],
        out_specs=(scal_spec, scal_spec, scal_spec, scal_spec),
        compiler_params=_cparams("parallel", "arbitrary"),
    )(logits_dm, labels_dm,
      params["dw1"].astype(jnp.bfloat16),
      params["db1"].reshape(1, -1),
      params["dw2"].reshape(1, -1),            # (DH,1) vector -> (1,DH)
      params["db2"].reshape(1, 1))
    return (ce.reshape(ndom), bce0.reshape(ndom),
            bce1.reshape(ndom), ent.reshape(ndom))


def adversarial_warmup_forward(params, cfg, s_img, t_img=None, s_lbl=None,
                               training=True):
    """Forward pass matching AdversarialWarmupSegmentor.forward.

    s_img / t_img are NCHW float32, s_lbl is (N, H, W) int32 class labels.
    """
    C = cfg["num_classes"]
    n, cin, H, W = s_img.shape

    def backbone_and_resize(img_nchw):
        x = jnp.transpose(img_nchw, (0, 2, 3, 1)).astype(jnp.float32)  # NHWC
        # TODO(synk): real build_seg_model() backbone is external; substituted
        # with a deterministic stride-2 subsample + fused 1x1-conv stack.
        x = x[:, ::2, ::2, :]
        nb, h, w, _ = x.shape
        feats = seg_backbone(x.reshape(nb * h * w, cin), params)   # (nb*h*w, C)
        return bilinear_resize(feats, nb, h, w, C, H, W)           # (nb, H, W*C)

    if not training:
        s_wide = backbone_and_resize(s_img)
        logits_nchw = jnp.transpose(s_wide.reshape(n, H, W, C), (0, 3, 1, 2))
        return {"logits": logits_nchw}

    # source + target are batched through one backbone call and one resize
    # call, then all losses come out of a single fused kernel (grid axis 0 =
    # domain).  detach() in the original only affects gradients, so forward
    # values coincide.
    wide = backbone_and_resize(jnp.concatenate([s_img, t_img], axis=0))
    m = n * H * W
    logits_dm = wide.reshape(2, m, C)            # contiguous: [source, target]
    labels_dm = jnp.concatenate(
        [s_lbl.reshape(1, m, 1).astype(jnp.int32),
         jnp.zeros((1, m, 1), jnp.int32)], axis=0)          # dummy t labels

    ce, bce0, bce1, ent = fused_domain_losses(
        logits_dm, labels_dm, params, num_classes=C,
        entropy_input=cfg["is_entropy_input"])

    # TODO(synk): seg_loss / D_loss types come from a registry; assumed
    # CrossEntropy and BCEWithLogits (the standard ADVENT configuration).
    losses = {}
    losses["source_seg_loss"] = cfg["seg_source_weight"] * ce[0]
    losses["adv_loss"] = cfg["adv_weight"] * bce0[1]           # t scored as 0
    losses["D_loss"] = cfg["D_weight"] * (bce0[0] + bce1[1]) / 2.0
    if cfg["ent_weight"] > 0:
        losses["target_ent_loss"] = cfg["ent_weight"] * ent[1]
    return losses


# ----------------------------- main -----------------------------

if __name__ == "__main__":
    N, CIN, H, W = 2, 3, 16, 16
    NUM_CLASSES = 8
    HIDDEN = 32
    D_HIDDEN = 32

    cfg = {
        "num_classes": NUM_CLASSES,
        "is_entropy_input": True,     # ADVENT-style: D sees entropy maps
        "seg_source_weight": 1.0,
        "adv_weight": 0.001,
        "D_weight": 1.0,
        "ent_weight": 0.005,
    }

    key = jax.random.PRNGKey(0)
    ks = jax.random.split(key, 8)
    params = {
        # synthetic seg model (1x1 convs as matmuls over channels)
        "w1": 0.1 * jax.random.normal(ks[0], (CIN, HIDDEN), jnp.float32),
        "b1": jnp.zeros((HIDDEN,), jnp.float32),
        "w2": 0.1 * jax.random.normal(ks[1], (HIDDEN, NUM_CLASSES), jnp.float32),
        "b2": jnp.zeros((NUM_CLASSES,), jnp.float32),
        # synthetic discriminator
        "dw1": 0.1 * jax.random.normal(ks[2], (NUM_CLASSES, D_HIDDEN), jnp.float32),
        "db1": jnp.zeros((D_HIDDEN,), jnp.float32),
        "dw2": 0.1 * jax.random.normal(ks[3], (D_HIDDEN, 1), jnp.float32),
        "db2": jnp.zeros((1,), jnp.float32),
    }

    s_img = jax.random.normal(ks[4], (N, CIN, H, W), jnp.float32)
    t_img = jax.random.normal(ks[5], (N, CIN, H, W), jnp.float32)
    s_lbl = jax.random.randint(ks[6], (N, H, W), 0, NUM_CLASSES, jnp.int32)

    # training-mode forward (all losses)
    losses = adversarial_warmup_forward(params, cfg, s_img, t_img, s_lbl,
                                        training=True)
    losses = jax.block_until_ready(losses)

    # eval-mode forward (returns logits in NCHW)
    eval_out = adversarial_warmup_forward(params, cfg, s_img, training=False)
    eval_out = jax.block_until_ready(eval_out)
    assert eval_out["logits"].shape == (N, NUM_CLASSES, H, W)
    assert all(np.isfinite(float(v)) for v in losses.values())

    print("KERNEL_OK")
</pallas_src>

<mosaic_0001>
module attributes {stable_mosaic.version = 11 : i64} {
  func.func @_seg_backbone_kernel(%arg0: i32, %arg1: memref<256x3xf32, #tpu.memory_space<vmem>>, %arg2: memref<3x32xf32, #tpu.memory_space<vmem>>, %arg3: memref<1x32xf32, #tpu.memory_space<vmem>>, %arg4: memref<32x8xbf16, #tpu.memory_space<vmem>>, %arg5: memref<1x8xf32, #tpu.memory_space<vmem>>, %arg6: memref<256x8xf32, #tpu.memory_space<vmem>>) attributes {dimension_semantics = [#tpu.dimension_semantics<parallel>], iteration_bounds = array<i64: 1>, scalar_prefetch = 0 : i64, scratch_operands = 0 : i64, tpu.core_type = #tpu.core_type<tc>, window_params = [{transform_indices = @transform_0, window_bounds = array<i64: 256, 3>}, {pipeline_mode = #tpu.pipeline_mode<synchronous>, transform_indices = @transform_1, window_bounds = array<i64: 3, 32>}, {pipeline_mode = #tpu.pipeline_mode<synchronous>, transform_indices = @transform_2, window_bounds = array<i64: 1, 32>}, {pipeline_mode = #tpu.pipeline_mode<synchronous>, transform_indices = @transform_3, window_bounds = array<i64: 32, 8>}, {pipeline_mode = #tpu.pipeline_mode<synchronous>, transform_indices = @transform_4, window_bounds = array<i64: 1, 8>}, {transform_indices = @transform_5, window_bounds = array<i64: 256, 8>}]} {
    %c0 = arith.constant 0 : index
    %c0_0 = arith.constant 0 : index
    %0 = vector.load %arg1[%c0, %c0_0] : memref<256x3xf32, #tpu.memory_space<vmem>>, vector<256x3xf32>
    %c0_1 = arith.constant 0 : index
    %c0_2 = arith.constant 0 : index
    %1 = vector.load %arg3[%c0_1, %c0_2] : memref<1x32xf32, #tpu.memory_space<vmem>>, vector<1x32xf32>
    %2 = vector.shape_cast %1 : vector<1x32xf32> to vector<1x32xf32>
    %3 = vector.broadcast %2 : vector<1x32xf32> to vector<256x32xf32>
    %4 = vector.extract_strided_slice %0 {offsets = [0, 0], sizes = [256, 1], strides = [1, 1]} : vector<256x3xf32> to vector<256x1xf32>
    %c0_3 = arith.constant 0 : index
    %c0_4 = arith.constant 0 : index
    %5 = vector.load %arg2[%c0_3, %c0_4] : memref<3x32xf32, #tpu.memory_space<vmem>>, vector<1x32xf32>
    %6 = vector.broadcast %4 : vector<256x1xf32> to vector<256x32xf32>
    %7 = vector.broadcast %5 : vector<1x32xf32> to vector<256x32xf32>
    %8 = arith.mulf %6, %7 : vector<256x32xf32>
    %9 = arith.addf %3, %8 : vector<256x32xf32>
    %10 = vector.extract_strided_slice %0 {offsets = [0, 1], sizes = [256, 1], strides = [1, 1]} : vector<256x3xf32> to vector<256x1xf32>
    %c1 = arith.constant 1 : index
    %c0_5 = arith.constant 0 : index
    %11 = vector.load %arg2[%c1, %c0_5] : memref<3x32xf32, #tpu.memory_space<vmem>>, vector<1x32xf32>
    %12 = vector.broadcast %10 : vector<256x1xf32> to vector<256x32xf32>
    %13 = vector.broadcast %11 : vector<1x32xf32> to vector<256x32xf32>
    %14 = arith.mulf %12, %13 : vector<256x32xf32>
    %15 = arith.addf %9, %14 : vector<256x32xf32>
    %16 = vector.extract_strided_slice %0 {offsets = [0, 2], sizes = [256, 1], strides = [1, 1]} : vector<256x3xf32> to vector<256x1xf32>
    %c2 = arith.constant 2 : index
    %c0_6 = arith.constant 0 : index
    %17 = vector.load %arg2[%c2, %c0_6] : memref<3x32xf32, #tpu.memory_space<vmem>>, vector<1x32xf32>
    %18 = vector.broadcast %16 : vector<256x1xf32> to vector<256x32xf32>
    %19 = vector.broadcast %17 : vector<1x32xf32> to vector<256x32xf32>
    %20 = arith.mulf %18, %19 : vector<256x32xf32>
    %21 = arith.addf %15, %20 : vector<256x32xf32>
    %cst = arith.constant 0.000000e+00 : f32
    %22 = vector.broadcast %cst : f32 to vector<256x32xf32>
    %23 = arith.maximumf %21, %22 : vector<256x32xf32>
    %24 = arith.truncf %23 : vector<256x32xf32> to vector<256x32xbf16>
    %c0_7 = arith.constant 0 : index
    %c0_8 = arith.constant 0 : index
    %25 = vector.load %arg4[%c0_7, %c0_8] : memref<32x8xbf16, #tpu.memory_space<vmem>>, vector<32x8xbf16>
    %cst_9 = arith.constant dense<0.000000e+00> : vector<256x8xf32>
    %26 = tpu.matmul %24, %25, %cst_9 {dimension_numbers = #tpu.dot_dimension_numbers<[1], [0], [0], [1], [0, 0, 1, 1], [], []>} : vector<256x32xbf16>, vector<32x8xbf16>, vector<256x8xf32> -> vector<256x8xf32>
    %c0_10 = arith.constant 0 : index
    %c0_11 = arith.constant 0 : index
    %27 = vector.load %arg5[%c0_10, %c0_11] : memref<1x8xf32, #tpu.memory_space<vmem>>, vector<1x8xf32>
    %28 = vector.broadcast %27 : vector<1x8xf32> to vector<256x8xf32>
    %29 = arith.addf %26, %28 : vector<256x8xf32>
    %c0_12 = arith.constant 0 : index
    %c0_13 = arith.constant 0 : index
    %30 = vector.load %arg6[%c0_12, %c0_13] : memref<256x8xf32, #tpu.memory_space<vmem>>, vector<256x8xf32>
    tpu.vector_store %arg6[%c0_12, %c0_13], %29 {strides = array<i32>} : memref<256x8xf32, #tpu.memory_space<vmem>>, vector<256x8xf32>,
    return
  }
  func.func @transform_0(%arg0: i32) -> (i32, i32) {
    %c0_i32 = arith.constant 0 : i32
    %c0_i32_0 = arith.constant 0 : i32
    return %arg0, %c0_i32 : i32, i32
  }
  func.func @transform_1(%arg0: i32) -> (i32, i32) {
    %c0_i32 = arith.constant 0 : i32
    %c0_i32_0 = arith.constant 0 : i32
    %c0_i32_1 = arith.constant 0 : i32
    return %c0_i32, %c0_i32_0 : i32, i32
  }
  func.func @transform_2(%arg0: i32) -> (i32, i32) {
    %c0_i32 = arith.constant 0 : i32
    %c0_i32_0 = arith.constant 0 : i32
    %c0_i32_1 = arith.constant 0 : i32
    return %c0_i32, %c0_i32_0 : i32, i32
  }
  func.func @transform_3(%arg0: i32) -> (i32, i32) {
    %c0_i32 = arith.constant 0 : i32
    %c0_i32_0 = arith.constant 0 : i32
    %c0_i32_1 = arith.constant 0 : i32
    return %c0_i32, %c0_i32_0 : i32, i32
  }
  func.func @transform_4(%arg0: i32) -> (i32, i32) {
    %c0_i32 = arith.constant 0 : i32
    %c0_i32_0 = arith.constant 0 : i32
    %c0_i32_1 = arith.constant 0 : i32
    return %c0_i32, %c0_i32_0 : i32, i32
  }
  func.func @transform_5(%arg0: i32) -> (i32, i32) {
    %c0_i32 = arith.constant 0 : i32
    %c0_i32_0 = arith.constant 0 : i32
    return %arg0, %c0_i32 : i32, i32
  }
}

</mosaic_0001>

<llo_original>
// kernel: tpu_custom_call.1
$region0: #{tpu_custom_call.1}
  #allocation0 [shape = 'u32[]', space=smem, size = 0x4, offset = 0x4, fixed_abs, tag = 'smem constant byte address 0x4 - core index']
  #allocation1 [shape = 'u32[144,128]{1,0:T(1,128)}', space=vmem, size = 0x12000, scoped, tag = 'internal scratch']
  %s0 = inlined_call_operand.vmem [shape: f32[256,3], index: 0, kind: input, shape index: {}]
  %s1 = inlined_call_operand.vmem [shape: f32[3,32], index: 1, kind: input, shape index: {}]
  %s2 = inlined_call_operand.vmem [shape: f32[1,32], index: 2, kind: input, shape index: {}]
  %s3 = inlined_call_operand.vmem [shape: bf16[32,8], index: 3, kind: input, shape index: {}]
  %s4 = inlined_call_operand.vmem [shape: f32[1,8], index: 4, kind: input, shape index: {}]
  %s5 = inlined_call_operand.vmem [shape: f32[256,8], index: 5, kind: output, shape index: {}]
  %s6 = sld [smem:[#allocation0]]
  $region30: #{tpu_custom_call.1} parent=0
    _
  %s8 = ssub.s32 1, %s6
  %s9 = scalar_select 0, %s8, %s6
  // Predicated region
  $region2: #{tpu_custom_call.1} parent=0 // pred_check
    _
  $region3: #{tpu_custom_call.1} parent=0 // pred_check_branch
    %11 = sbr.rel (0) target = $region5
  $region4: #{tpu_custom_call.1} parent=0 // pred_region
    _
  $region5: #{tpu_custom_call.1} parent=0 // pred_fallthru
    _
  // Predicated region
  $region6: #{tpu_custom_call.1} parent=0 // pred_check
    _
  $region7: #{tpu_custom_call.1} parent=0 // pred_check_branch
    %13 = sbr.rel (0) target = $region9
  $region8: #{tpu_custom_call.1} parent=0 // pred_region
    _
  $region9: #{tpu_custom_call.1} parent=0 // pred_fallthru
    _
  // Predicated region
  $region10: #{tpu_custom_call.1} parent=0 // pred_check
    _
  $region11: #{tpu_custom_call.1} parent=0 // pred_check_branch
    %15 = sbr.rel (0) target = $region13
  $region12: #{tpu_custom_call.1} parent=0 // pred_region
    _
  $region13: #{tpu_custom_call.1} parent=0 // pred_fallthru
    _
  // Predicated region
  $region14: #{tpu_custom_call.1} parent=0 // pred_check
    _
  $region15: #{tpu_custom_call.1} parent=0 // pred_check_branch
    %17 = sbr.rel (0) target = $region17
  $region16: #{tpu_custom_call.1} parent=0 // pred_region
    _
  $region17: #{tpu_custom_call.1} parent=0 // pred_fallthru
    _
  // Predicated region
  $region18: #{tpu_custom_call.1} parent=0 // pred_check
    _
  $region19: #{tpu_custom_call.1} parent=0 // pred_check_branch
    %19 = sbr.rel (0) target = $region21
  $region20: #{tpu_custom_call.1} parent=0 // pred_region
    _
  $region21: #{tpu_custom_call.1} parent=0 // pred_fallthru
    _
  %v21 = vld [vmem:[%s0] sm:$0xff]
  %v22 = vld [vmem:[%s0 + $0x8] sm:$0xff]
  %v23 = vld [vmem:[%s0 + $0x10] sm:$0xff]
  %v24 = vld [vmem:[%s0 + $0x18] sm:$0xff]
  %v25 = vld [vmem:[%s0 + $0x20] sm:$0xff]
  %v26 = vld [vmem:[%s0 + $0x28] sm:$0xff]
  %v27 = vld [vmem:[%s0 + $0x30] sm:$0xff]
  %v28 = vld [vmem:[%s0 + $0x38] sm:$0xff]
  %v29 = vld [vmem:[%s0 + $0x40] sm:$0xff]
  %v30 = vld [vmem:[%s0 + $0x48] sm:$0xff]
  %v31 = vld [vmem:[%s0 + $0x50] sm:$0xff]
  %v32 = vld [vmem:[%s0 + $0x58] sm:$0xff]
  %v33 = vld [vmem:[%s0 + $0x60] sm:$0xff]
  %v34 = vld [vmem:[%s0 + $0x68] sm:$0xff]
  %v35 = vld [vmem:[%s0 + $0x70] sm:$0xff]
  %v36 = vld [vmem:[%s0 + $0x78] sm:$0xff]
  %v37 = vld [vmem:[%s0 + $0x80] sm:$0xff]
  %v38 = vld [vmem:[%s0 + $0x88] sm:$0xff]
  %v39 = vld [vmem:[%s0 + $0x90] sm:$0xff]
  %v40 = vld [vmem:[%s0 + $0x98] sm:$0xff]
  %v41 = vld [vmem:[%s0 + $0xa0] sm:$0xff]
  %v42 = vld [vmem:[%s0 + $0xa8] sm:$0xff]
  %v43 = vld [vmem:[%s0 + $0xb0] sm:$0xff]
  %v44 = vld [vmem:[%s0 + $0xb8] sm:$0xff]
  %v45 = vld [vmem:[%s0 + $0xc0] sm:$0xff]
  %v46 = vld [vmem:[%s0 + $0xc8] sm:$0xff]
  %v47 = vld [vmem:[%s0 + $0xd0] sm:$0xff]
  %v48 = vld [vmem:[%s0 + $0xd8] sm:$0xff]
  %v49 = vld [vmem:[%s0 + $0xe0] sm:$0xff]
  %v50 = vld [vmem:[%s0 + $0xe8] sm:$0xff]
  %v51 = vld [vmem:[%s0 + $0xf0] sm:$0xff]
  %v52 = vld [vmem:[%s0 + $0xf8] sm:$0xff]
  %v53 = vld [vmem:[%s2] sm:$0x1]
  %v55 = vlaneseq
  %v56 = vshrl.u32 %v55, 7
  %v57 = vsub.s32 0, %v56
  %v58 = vrot.slane %v53, %v57
  %v60 = vld [vmem:[%s1] sm:$0x1]
  %62 = vset.pattern.permute.xlu0 0
  %63 = vperm.xlu0 %62, %v21
  %v64 = vpop.permute.xlu0 %63
  %67 = vset.pattern.permute.xlu0 0
  %68 = vperm.xlu0 %67, %v22
  %v69 = vpop.permute.xlu0 %68
  %72 = vset.pattern.permute.xlu0 0
  %73 = vperm.xlu0 %72, %v23
  %v74 = vpop.permute.xlu0 %73
  %77 = vset.pattern.permute.xlu0 0
  %78 = vperm.xlu0 %77, %v24
  %v79 = vpop.permute.xlu0 %78
  %82 = vset.pattern.permute.xlu0 0
  %83 = vperm.xlu0 %82, %v25
  %v84 = vpop.permute.xlu0 %83
  %87 = vset.pattern.permute.xlu0 0
  %88 = vperm.xlu0 %87, %v26
  %v89 = vpop.permute.xlu0 %88
  %92 = vset.pattern.permute.xlu0 0
  %93 = vperm.xlu0 %92, %v27
  %v94 = vpop.permute.xlu0 %93
  %97 = vset.pattern.permute.xlu0 0
  %98 = vperm.xlu0 %97, %v28
  %v99 = vpop.permute.xlu0 %98
  %102 = vset.pattern.permute.xlu0 0
  %103 = vperm.xlu0 %102, %v29
  %v104 = vpop.permute.xlu0 %103
  %107 = vset.pattern.permute.xlu0 0
  %108 = vperm.xlu0 %107, %v30
  %v109 = vpop.permute.xlu0 %108
  %112 = vset.pattern.permute.xlu0 0
  %113 = vperm.xlu0 %112, %v31
  %v114 = vpop.permute.xlu0 %113
  %117 = vset.pattern.permute.xlu0 0
  %118 = vperm.xlu0 %117, %v32
  %v119 = vpop.permute.xlu0 %118
  %122 = vset.pattern.permute.xlu0 0
  %123 = vperm.xlu0 %122, %v33
  %v124 = vpop.permute.xlu0 %123
  %127 = vset.pattern.permute.xlu0 0
  %128 = vperm.xlu0 %127, %v34
  %v129 = vpop.permute.xlu0 %128
  %132 = vset.pattern.permute.xlu0 0
  %133 = vperm.xlu0 %132, %v35
  %v134 = vpop.permute.xlu0 %133
  %137 = vset.pattern.permute.xlu0 0
  %138 = vperm.xlu0 %137, %v36
  %v139 = vpop.permute.xlu0 %138
  %142 = vset.pattern.permute.xlu0 0
  %143 = vperm.xlu0 %142, %v37
  %v144 = vpop.permute.xlu0 %143
  %147 = vset.pattern.permute.xlu0 0
  %148 = vperm.xlu0 %147, %v38
  %v149 = vpop.permute.xlu0 %148
  %152 = vset.pattern.permute.xlu0 0
  %153 = vperm.xlu0 %152, %v39
  %v154 = vpop.permute.xlu0 %153
  %157 = vset.pattern.permute.xlu0 0
  %158 = vperm.xlu0 %157, %v40
  %v159 = vpop.permute.xlu0 %158
  %162 = vset.pattern.permute.xlu0 0
  %163 = vperm.xlu0 %162, %v41
  %v164 = vpop.permute.xlu0 %163
  %167 = vset.pattern.permute.xlu0 0
  %168 = vperm.xlu0 %167, %v42
  %v169 = vpop.permute.xlu0 %168
  %172 = vset.pattern.permute.xlu0 0
  %173 = vperm.xlu0 %172, %v43
  %v174 = vpop.permute.xlu0 %173
  %177 = vset.pattern.permute.xlu0 0
  %178 = vperm.xlu0 %177, %v44
  %v179 = vpop.permute.xlu0 %178
  %182 = vset.pattern.permute.xlu0 0
  %183 = vperm.xlu0 %182, %v45
  %v184 = vpop.permute.xlu0 %183
  %187 = vset.pattern.permute.xlu0 0
  %188 = vperm.xlu0 %187, %v46
  %v189 = vpop.permute.xlu0 %188
  %192 = vset.pattern.permute.xlu0 0
  %193 = vperm.xlu0 %192, %v47
  %v194 = vpop.permute.xlu0 %193
  %197 = vset.pattern.permute.xlu0 0
  %198 = vperm.xlu0 %197, %v48
  %v199 = vpop.permute.xlu0 %198
  %202 = vset.pattern.permute.xlu0 0
  %203 = vperm.xlu0 %202, %v49
  %v204 = vpop.permute.xlu0 %203
  %207 = vset.pattern.permute.xlu0 0
  %208 = vperm.xlu0 %207, %v50
  %v209 = vpop.permute.xlu0 %208
  %212 = vset.pattern.permute.xlu0 0
  %213 = vperm.xlu0 %212, %v51
  %v214 = vpop.permute.xlu0 %213
  %217 = vset.pattern.permute.xlu0 0
  %218 = vperm.xlu0 %217, %v52
  %v219 = vpop.permute.xlu0 %218
  %v221 = vlaneseq
  %v222 = vshrl.u32 %v221, 7
  %v223 = vsub.s32 0, %v222
  %v224 = vrot.slane %v60, %v223
  %v225 = vmul.f32 %v64, %v224
  %v226 = vmul.f32 %v69, %v224
  %v227 = vmul.f32 %v74, %v224
  %v228 = vmul.f32 %v79, %v224
  %v229 = vmul.f32 %v84, %v224
  %v230 = vmul.f32 %v89, %v224
  %v231 = vmul.f32 %v94, %v224
  %v232 = vmul.f32 %v99, %v224
  %v233 = vmul.f32 %v104, %v224
  %v234 = vmul.f32 %v109, %v224
  %v235 = vmul.f32 %v114, %v224
  %v236 = vmul.f32 %v119, %v224
  %v237 = vmul.f32 %v124, %v224
  %v238 = vmul.f32 %v129, %v224
  %v239 = vmul.f32 %v134, %v224
  %v240 = vmul.f32 %v139, %v224
  %v241 = vmul.f32 %v144, %v224
  %v242 = vmul.f32 %v149, %v224
  %v243 = vmul.f32 %v154, %v224
  %v244 = vmul.f32 %v159, %v224
  %v245 = vmul.f32 %v164, %v224
  %v246 = vmul.f32 %v169, %v224
  %v247 = vmul.f32 %v174, %v224
  %v248 = vmul.f32 %v179, %v224
  %v249 = vmul.f32 %v184, %v224
  %v250 = vmul.f32 %v189, %v224
  %v251 = vmul.f32 %v194, %v224
  %v252 = vmul.f32 %v199, %v224
  %v253 = vmul.f32 %v204, %v224
  %v254 = vmul.f32 %v209, %v224
  %v255 = vmul.f32 %v214, %v224
  %v256 = vmul.f32 %v219, %v224
  %v257 = vadd.f32 %v58, %v225
  %v258 = vadd.f32 %v58, %v226
  %v259 = vadd.f32 %v58, %v227
  %v260 = vadd.f32 %v58, %v228
  %v261 = vadd.f32 %v58, %v229
  %v262 = vadd.f32 %v58, %v230
  %v263 = vadd.f32 %v58, %v231
  %v264 = vadd.f32 %v58, %v232
  %v265 = vadd.f32 %v58, %v233
  %v266 = vadd.f32 %v58, %v234
  %v267 = vadd.f32 %v58, %v235
  %v268 = vadd.f32 %v58, %v236
  %v269 = vadd.f32 %v58, %v237
  %v270 = vadd.f32 %v58, %v238
  %v271 = vadd.f32 %v58, %v239
  %v272 = vadd.f32 %v58, %v240
  %v273 = vadd.f32 %v58, %v241
  %v274 = vadd.f32 %v58, %v242
  %v275 = vadd.f32 %v58, %v243
  %v276 = vadd.f32 %v58, %v244
  %v277 = vadd.f32 %v58, %v245
  %v278 = vadd.f32 %v58, %v246
  %v279 = vadd.f32 %v58, %v247
  %v280 = vadd.f32 %v58, %v248
  %v281 = vadd.f32 %v58, %v249
  %v282 = vadd.f32 %v58, %v250
  %v283 = vadd.f32 %v58, %v251
  %v284 = vadd.f32 %v58, %v252
  %v285 = vadd.f32 %v58, %v253
  %v286 = vadd.f32 %v58, %v254
  %v287 = vadd.f32 %v58, %v255
  %v288 = vadd.f32 %v58, %v256
  %v289 = vld [vmem:[%s1 + $0x1] sm:$0x1]
  %290 = vset.pattern.permute.xlu0 1
  %291 = vperm.xlu0 %290, %v21
  %v292 = vpop.permute.xlu0 %291
  %294 = vset.pattern.permute.xlu0 1
  %295 = vperm.xlu0 %294, %v22
  %v296 = vpop.permute.xlu0 %295
  %298 = vset.pattern.permute.xlu0 1
  %299 = vperm.xlu0 %298, %v23
  %v300 = vpop.permute.xlu0 %299
  %302 = vset.pattern.permute.xlu0 1
  %303 = vperm.xlu0 %302, %v24
  %v304 = vpop.permute.xlu0 %303
  %306 = vset.pattern.permute.xlu0 1
  %307 = vperm.xlu0 %306, %v25
  %v308 = vpop.permute.xlu0 %307
  %310 = vset.pattern.permute.xlu0 1
  %311 = vperm.xlu0 %310, %v26
  %v312 = vpop.permute.xlu0 %311
  %314 = vset.pattern.permute.xlu0 1
  %315 = vperm.xlu0 %314, %v27
  %v316 = vpop.permute.xlu0 %315
  %318 = vset.pattern.permute.xlu0 1
  %319 = vperm.xlu0 %318, %v28
  %v320 = vpop.permute.xlu0 %319
  %322 = vset.pattern.permute.xlu0 1
  %323 = vperm.xlu0 %322, %v29
  %v324 = vpop.permute.xlu0 %323
  %326 = vset.pattern.permute.xlu0 1
  %327 = vperm.xlu0 %326, %v30
  %v328 = vpop.permute.xlu0 %327
  %330 = vset.pattern.permute.xlu0 1
  %331 = vperm.xlu0 %330, %v31
  %v332 = vpop.permute.xlu0 %331
  %334 = vset.pattern.permute.xlu0 1
  %335 = vperm.xlu0 %334, %v32
  %v336 = vpop.permute.xlu0 %335
  %338 = vset.pattern.permute.xlu0 1
  %339 = vperm.xlu0 %338, %v33
  %v340 = vpop.permute.xlu0 %339
  %342 = vset.pattern.permute.xlu0 1
  %343 = vperm.xlu0 %342, %v34
  %v344 = vpop.permute.xlu0 %343
  %346 = vset.pattern.permute.xlu0 1
  %347 = vperm.xlu0 %346, %v35
  %v348 = vpop.permute.xlu0 %347
  %350 = vset.pattern.permute.xlu0 1
  %351 = vperm.xlu0 %350, %v36
  %v352 = vpop.permute.xlu0 %351
  %354 = vset.pattern.permute.xlu0 1
  %355 = vperm.xlu0 %354, %v37
  %v356 = vpop.permute.xlu0 %355
  %358 = vset.pattern.permute.xlu0 1
  %359 = vperm.xlu0 %358, %v38
  %v360 = vpop.permute.xlu0 %359
  %362 = vset.pattern.permute.xlu0 1
  %363 = vperm.xlu0 %362, %v39
  %v364 = vpop.permute.xlu0 %363
  %366 = vset.pattern.permute.xlu0 1
  %367 = vperm.xlu0 %366, %v40
  %v368 = vpop.permute.xlu0 %367
  %370 = vset.pattern.permute.xlu0 1
  %371 = vperm.xlu0 %370, %v41
  %v372 = vpop.permute.xlu0 %371
  %374 = vset.pattern.permute.xlu0 1
  %375 = vperm.xlu0 %374, %v42
  %v376 = vpop.permute.xlu0 %375
  %378 = vset.pattern.permute.xlu0 1
  %379 = vperm.xlu0 %378, %v43
  %v380 = vpop.permute.xlu0 %379
  %382 = vset.pattern.permute.xlu0 1
  %383 = vperm.xlu0 %382, %v44
  %v384 = vpop.permute.xlu0 %383
  %386 = vset.pattern.permute.xlu0 1
  %387 = vperm.xlu0 %386, %v45
  %v388 = vpop.permute.xlu0 %387
  %390 = vset.pattern.permute.xlu0 1
  %391 = vperm.xlu0 %390, %v46
  %v392 = vpop.permute.xlu0 %391
  %394 = vset.pattern.permute.xlu0 1
  %395 = vperm.xlu0 %394, %v47
  %v396 = vpop.permute.xlu0 %395
  %398 = vset.pattern.permute.xlu0 1
  %399 = vperm.xlu0 %398, %v48
  %v400 = vpop.permute.xlu0 %399
  %402 = vset.pattern.permute.xlu0 1
  %403 = vperm.xlu0 %402, %v49
  %v404 = vpop.permute.xlu0 %403
  %406 = vset.pattern.permute.xlu0 1
  %407 = vperm.xlu0 %406, %v50
  %v408 = vpop.permute.xlu0 %407
  %410 = vset.pattern.permute.xlu0 1
  %411 = vperm.xlu0 %410, %v51
  %v412 = vpop.permute.xlu0 %411
  %414 = vset.pattern.permute.xlu0 1
  %415 = vperm.xlu0 %414, %v52
  %v416 = vpop.permute.xlu0 %415
  %v418 = vlaneseq
  %v419 = vshrl.u32 %v418, 7
  %v420 = vsub.s32 0, %v419
  %v421 = vrot.slane %v289, %v420
  %v422 = vmul.f32 %v292, %v421
  %v423 = vmul.f32 %v296, %v421
  %v424 = vmul.f32 %v300, %v421
  %v425 = vmul.f32 %v304, %v421
  %v426 = vmul.f32 %v308, %v421
  %v427 = vmul.f32 %v312, %v421
  %v428 = vmul.f32 %v316, %v421
  %v429 = vmul.f32 %v320, %v421
  %v430 = vmul.f32 %v324, %v421
  %v431 = vmul.f32 %v328, %v421
  %v432 = vmul.f32 %v332, %v421
  %v433 = vmul.f32 %v336, %v421
  %v434 = vmul.f32 %v340, %v421
  %v435 = vmul.f32 %v344, %v421
  %v436 = vmul.f32 %v348, %v421
  %v437 = vmul.f32 %v352, %v421
  %v438 = vmul.f32 %v356, %v421
  %v439 = vmul.f32 %v360, %v421
  %v440 = vmul.f32 %v364, %v421
  %v441 = vmul.f32 %v368, %v421
  %v442 = vmul.f32 %v372, %v421
  %v443 = vmul.f32 %v376, %v421
  %v444 = vmul.f32 %v380, %v421
  %v445 = vmul.f32 %v384, %v421
  %v446 = vmul.f32 %v388, %v421
  %v447 = vmul.f32 %v392, %v421
  %v448 = vmul.f32 %v396, %v421
  %v449 = vmul.f32 %v400, %v421
  %v450 = vmul.f32 %v404, %v421
  %v451 = vmul.f32 %v408, %v421
  %v452 = vmul.f32 %v412, %v421
  %v453 = vmul.f32 %v416, %v421
  %v454 = vadd.f32 %v257, %v422
  %v455 = vadd.f32 %v258, %v423
  %v456 = vadd.f32 %v259, %v424
  %v457 = vadd.f32 %v260, %v425
  %v458 = vadd.f32 %v261, %v426
  %v459 = vadd.f32 %v262, %v427
  %v460 = vadd.f32 %v263, %v428
  %v461 = vadd.f32 %v264, %v429
  %v462 = vadd.f32 %v265, %v430
  %v463 = vadd.f32 %v266, %v431
  %v464 = vadd.f32 %v267, %v432
  %v465 = vadd.f32 %v268, %v433
  %v466 = vadd.f32 %v269, %v434
  %v467 = vadd.f32 %v270, %v435
  %v468 = vadd.f32 %v271, %v436
  %v469 = vadd.f32 %v272, %v437
  %v470 = vadd.f32 %v273, %v438
  %v471 = vadd.f32 %v274, %v439
  %v472 = vadd.f32 %v275, %v440
  %v473 = vadd.f32 %v276, %v441
  %v474 = vadd.f32 %v277, %v442
  %v475 = vadd.f32 %v278, %v443
  %v476 = vadd.f32 %v279, %v444
  %v477 = vadd.f32 %v280, %v445
  %v478 = vadd.f32 %v281, %v446
  %v479 = vadd.f32 %v282, %v447
  %v480 = vadd.f32 %v283, %v448
  %v481 = vadd.f32 %v284, %v449
  %v482 = vadd.f32 %v285, %v450
  %v483 = vadd.f32 %v286, %v451
  %v484 = vadd.f32 %v287, %v452
  %v485 = vadd.f32 %v288, %v453
  %v486 = vld [vmem:[%s1 + $0x2] sm:$0x1]
  %487 = vset.pattern.permute.xlu0 2
  %488 = vperm.xlu0 %487, %v21
  %v489 = vpop.permute.xlu0 %488
  %491 = vset.pattern.permute.xlu0 2
  %492 = vperm.xlu0 %491, %v22
  %v493 = vpop.permute.xlu0 %492
  %495 = vset.pattern.permute.xlu0 2
  %496 = vperm.xlu0 %495, %v23
  %v497 = vpop.permute.xlu0 %496
  %499 = vset.pattern.permute.xlu0 2
  %500 = vperm.xlu0 %499, %v24
  %v501 = vpop.permute.xlu0 %500
  %503 = vset.pattern.permute.xlu0 2
  %504 = vperm.xlu0 %503, %v25
  %v505 = vpop.permute.xlu0 %504
  %507 = vset.pattern.permute.xlu0 2
  %508 = vperm.xlu0 %507, %v26
  %v509 = vpop.permute.xlu0 %508
  %511 = vset.pattern.permute.xlu0 2
  %512 = vperm.xlu0 %511, %v27
  %v513 = vpop.permute.xlu0 %512
  %515 = vset.pattern.permute.xlu0 2
  %516 = vperm.xlu0 %515, %v28
  %v517 = vpop.permute.xlu0 %516
  %519 = vset.pattern.permute.xlu0 2
  %520 = vperm.xlu0 %519, %v29
  %v521 = vpop.permute.xlu0 %520
  %523 = vset.pattern.permute.xlu0 2
  %524 = vperm.xlu0 %523, %v30
  %v525 = vpop.permute.xlu0 %524
  %527 = vset.pattern.permute.xlu0 2
  %528 = vperm.xlu0 %527, %v31
  %v529 = vpop.permute.xlu0 %528
  %531 = vset.pattern.permute.xlu0 2
  %532 = vperm.xlu0 %531, %v32
  %v533 = vpop.permute.xlu0 %532
  %535 = vset.pattern.permute.xlu0 2
  %536 = vperm.xlu0 %535, %v33
  %v537 = vpop.permute.xlu0 %536
  %539 = vset.pattern.permute.xlu0 2
  %540 = vperm.xlu0 %539, %v34
  %v541 = vpop.permute.xlu0 %540
  %543 = vset.pattern.permute.xlu0 2
  %544 = vperm.xlu0 %543, %v35
  %v545 = vpop.permute.xlu0 %544
  %547 = vset.pattern.permute.xlu0 2
  %548 = vperm.xlu0 %547, %v36
  %v549 = vpop.permute.xlu0 %548
  %551 = vset.pattern.permute.xlu0 2
  %552 = vperm.xlu0 %551, %v37
  %v553 = vpop.permute.xlu0 %552
  %555 = vset.pattern.permute.xlu0 2
  %556 = vperm.xlu0 %555, %v38
  %v557 = vpop.permute.xlu0 %556
  %559 = vset.pattern.permute.xlu0 2
  %560 = vperm.xlu0 %559, %v39
  %v561 = vpop.permute.xlu0 %560
  %563 = vset.pattern.permute.xlu0 2
  %564 = vperm.xlu0 %563, %v40
  %v565 = vpop.permute.xlu0 %564
  %567 = vset.pattern.permute.xlu0 2
  %568 = vperm.xlu0 %567, %v41
  %v569 = vpop.permute.xlu0 %568
  %571 = vset.pattern.permute.xlu0 2
  %572 = vperm.xlu0 %571, %v42
  %v573 = vpop.permute.xlu0 %572
  %575 = vset.pattern.permute.xlu0 2
  %576 = vperm.xlu0 %575, %v43
  %v577 = vpop.permute.xlu0 %576
  %579 = vset.pattern.permute.xlu0 2
  %580 = vperm.xlu0 %579, %v44
  %v581 = vpop.permute.xlu0 %580
  %583 = vset.pattern.permute.xlu0 2
  %584 = vperm.xlu0 %583, %v45
  %v585 = vpop.permute.xlu0 %584
  %587 = vset.pattern.permute.xlu0 2
  %588 = vperm.xlu0 %587, %v46
  %v589 = vpop.permute.xlu0 %588
  %591 = vset.pattern.permute.xlu0 2
  %592 = vperm.xlu0 %591, %v47
  %v593 = vpop.permute.xlu0 %592
  %595 = vset.pattern.permute.xlu0 2
  %596 = vperm.xlu0 %595, %v48
  %v597 = vpop.permute.xlu0 %596
  %599 = vset.pattern.permute.xlu0 2
  %600 = vperm.xlu0 %599, %v49
  %v601 = vpop.permute.xlu0 %600
  %603 = vset.pattern.permute.xlu0 2
  %604 = vperm.xlu0 %603, %v50
  %v605 = vpop.permute.xlu0 %604
  %607 = vset.pattern.permute.xlu0 2
  %608 = vperm.xlu0 %607, %v51
  %v609 = vpop.permute.xlu0 %608
  %611 = vset.pattern.permute.xlu0 2
  %612 = vperm.xlu0 %611, %v52
  %v613 = vpop.permute.xlu0 %612
  %v615 = vlaneseq
  %v616 = vshrl.u32 %v615, 7
  %v617 = vsub.s32 0, %v616
  %v618 = vrot.slane %v486, %v617
  %v619 = vmul.f32 %v489, %v618
  %v620 = vmul.f32 %v493, %v618
  %v621 = vmul.f32 %v497, %v618
  %v622 = vmul.f32 %v501, %v618
  %v623 = vmul.f32 %v505, %v618
  %v624 = vmul.f32 %v509, %v618
  %v625 = vmul.f32 %v513, %v618
  %v626 = vmul.f32 %v517, %v618
  %v627 = vmul.f32 %v521, %v618
  %v628 = vmul.f32 %v525, %v618
  %v629 = vmul.f32 %v529, %v618
  %v630 = vmul.f32 %v533, %v618
  %v631 = vmul.f32 %v537, %v618
  %v632 = vmul.f32 %v541, %v618
  %v633 = vmul.f32 %v545, %v618
  %v634 = vmul.f32 %v549, %v618
  %v635 = vmul.f32 %v553, %v618
  %v636 = vmul.f32 %v557, %v618
  %v637 = vmul.f32 %v561, %v618
  %v638 = vmul.f32 %v565, %v618
  %v639 = vmul.f32 %v569, %v618
  %v640 = vmul.f32 %v573, %v618
  %v641 = vmul.f32 %v577, %v618
  %v642 = vmul.f32 %v581, %v618
  %v643 = vmul.f32 %v585, %v618
  %v644 = vmul.f32 %v589, %v618
  %v645 = vmul.f32 %v593, %v618
  %v646 = vmul.f32 %v597, %v618
  %v647 = vmul.f32 %v601, %v618
  %v648 = vmul.f32 %v605, %v618
  %v649 = vmul.f32 %v609, %v618
  %v650 = vmul.f32 %v613, %v618
  %v651 = vadd.f32 %v454, %v619
  %v652 = vadd.f32 %v455, %v620
  %v653 = vadd.f32 %v456, %v621
  %v654 = vadd.f32 %v457, %v622
  %v655 = vadd.f32 %v458, %v623
  %v656 = vadd.f32 %v459, %v624
  %v657 = vadd.f32 %v460, %v625
  %v658 = vadd.f32 %v461, %v626
  %v659 = vadd.f32 %v462, %v627
  %v660 = vadd.f32 %v463, %v628
  %v661 = vadd.f32 %v464, %v629
  %v662 = vadd.f32 %v465, %v630
  %v663 = vadd.f32 %v466, %v631
  %v664 = vadd.f32 %v467, %v632
  %v665 = vadd.f32 %v468, %v633
  %v666 = vadd.f32 %v469, %v634
  %v667 = vadd.f32 %v470, %v635
  %v668 = vadd.f32 %v471, %v636
  %v669 = vadd.f32 %v472, %v637
  %v670 = vadd.f32 %v473, %v638
  %v671 = vadd.f32 %v474, %v639
  %v672 = vadd.f32 %v475, %v640
  %v673 = vadd.f32 %v476, %v641
  %v674 = vadd.f32 %v477, %v642
  %v675 = vadd.f32 %v478, %v643
  %v676 = vadd.f32 %v479, %v644
  %v677 = vadd.f32 %v480, %v645
  %v678 = vadd.f32 %v481, %v646
  %v679 = vadd.f32 %v482, %v647
  %v680 = vadd.f32 %v483, %v648
  %v681 = vadd.f32 %v484, %v649
  %v682 = vadd.f32 %v485, %v650
  %v683 = vmax.f32 %v651, 0.0
  %v684 = vmax.f32 %v652, 0.0
  %v685 = vmax.f32 %v653, 0.0
  %v686 = vmax.f32 %v654, 0.0
  %v687 = vmax.f32 %v655, 0.0
  %v688 = vmax.f32 %v656, 0.0
  %v689 = vmax.f32 %v657, 0.0
  %v690 = vmax.f32 %v658, 0.0
  %v691 = vmax.f32 %v659, 0.0
  %v692 = vmax.f32 %v660, 0.0
  %v693 = vmax.f32 %v661, 0.0
  %v694 = vmax.f32 %v662, 0.0
  %v695 = vmax.f32 %v663, 0.0
  %v696 = vmax.f32 %v664, 0.0
  %v697 = vmax.f32 %v665, 0.0
  %v698 = vmax.f32 %v666, 0.0
  %v699 = vmax.f32 %v667, 0.0
  %v700 = vmax.f32 %v668, 0.0
  %v701 = vmax.f32 %v669, 0.0
  %v702 = vmax.f32 %v670, 0.0
  %v703 = vmax.f32 %v671, 0.0
  %v704 = vmax.f32 %v672, 0.0
  %v705 = vmax.f32 %v673, 0.0
  %v706 = vmax.f32 %v674, 0.0
  %v707 = vmax.f32 %v675, 0.0
  %v708 = vmax.f32 %v676, 0.0
  %v709 = vmax.f32 %v677, 0.0
  %v710 = vmax.f32 %v678, 0.0
  %v711 = vmax.f32 %v679, 0.0
  %v712 = vmax.f32 %v680, 0.0
  %v713 = vmax.f32 %v681, 0.0
  %v714 = vmax.f32 %v682, 0.0
  %v715 = vpack.c.bf16 %v684, %v683
  %v716 = vpack.c.bf16 %v686, %v685
  %v717 = vpack.c.bf16 %v688, %v687
  %v718 = vpack.c.bf16 %v690, %v689
  %v719 = vpack.c.bf16 %v692, %v691
  %v720 = vpack.c.bf16 %v694, %v693
  %v721 = vpack.c.bf16 %v696, %v695
  %v722 = vpack.c.bf16 %v698, %v697
  %v723 = vpack.c.bf16 %v700, %v699
  %v724 = vpack.c.bf16 %v702, %v701
  %v725 = vpack.c.bf16 %v704, %v703
  %v726 = vpack.c.bf16 %v706, %v705
  %v727 = vpack.c.bf16 %v708, %v707
  %v728 = vpack.c.bf16 %v710, %v709
  %v729 = vpack.c.bf16 %v712, %v711
  %v730 = vpack.c.bf16 %v714, %v713
  %v731 = vld [vmem:[%s3] sm:$0xf]
  %v732 = vld [vmem:[%s3 + $0x4] sm:$0xf]
  %v733 = vld [vmem:[%s3 + $0x8] sm:$0xf]
  %v734 = vld [vmem:[%s3 + $0xc] sm:$0xf]
  %v735 = vld [vmem:[%s4] sm:$0x1]
  %v737 = vlaneseq
  %v738 = vshrl.u32 %v737, 7
  %v739 = vsub.s32 0, %v738
  %v740 = vrot.slane %v735, %v739
  %v746 = vunpack.c.l.b16 %v731
  %v747 = vunpack.c.l.b16 %v732
  %v748 = vunpack.c.l.b16 %v733
  %v749 = vunpack.c.l.b16 %v734
  %v750 = vpack.c.b16 %v747, %v746
  %v751 = vpack.c.b16 %v749, %v748
  %vm754 = vcmask 261120
  %v756 = vsel %vm754, %v715, 0
  %v759 = vsel %vm754, %v716, 0
  %v762 = vsel %vm754, %v717, 0
  %v765 = vsel %vm754, %v718, 0
  %v768 = vsel %vm754, %v719, 0
  %v771 = vsel %vm754, %v720, 0
  %v774 = vsel %vm754, %v721, 0
  %v777 = vsel %vm754, %v722, 0
  %v780 = vsel %vm754, %v723, 0
  %v783 = vsel %vm754, %v724, 0
  %v786 = vsel %vm754, %v725, 0
  %v789 = vsel %vm754, %v726, 0
  %v792 = vsel %vm754, %v727, 0
  %v795 = vsel %vm754, %v728, 0
  %v798 = vsel %vm754, %v729, 0
  %v801 = vsel %vm754, %v730, 0
  %803 = vmatprep.subr.bf16.mxu0 0
  %804 = vmatpush1.bf16.msra.mxu0 0
  %805 = vmatprep.subr.bf16.mxu0 0
  %806 = vmatpush1.bf16.msra.mxu0 0
  %807 = vmatprep.subr.bf16.mxu0 0
  %808 = vmatpush1.bf16.msra.mxu0 0
  %809 = vmatprep.subr.bf16.mxu0 0
  %810 = vmatpush1.bf16.msra.mxu0 0
  %811 = vmatprep.subr.bf16.mxu0 0
  %812 = vmatpush1.bf16.msra.mxu0 0
  %813 = vmatprep.subr.bf16.mxu0 0
  %814 = vmatpush1.bf16.msra.mxu0 0
  %815 = vmatprep.subr.bf16.mxu0 0
  %816 = vmatpush1.bf16.msra.mxu0 %v751
  %817 = vmatprep.subr.bf16.mxu0 0
  %818 = vmatpush1.bf16.msra.mxu0 %v750
  %819 = vmatprep.subr.bf16.mxu0 0
  %820 = vmatpush2.bf16.msra.mxu0 0
  %821 = vmatprep.subr.bf16.mxu0 0
  %822 = vmatpush2.bf16.msra.mxu0 0
  %823 = vmatprep.subr.bf16.mxu0 0
  %824 = vmatpush2.bf16.msra.mxu0 0
  %825 = vmatprep.subr.bf16.mxu0 0
  %826 = vmatpush2.bf16.msra.mxu0 0
  %827 = vmatprep.subr.bf16.mxu0 0
  %828 = vmatpush2.bf16.msra.mxu0 0
  %829 = vmatprep.subr.bf16.mxu0 0
  %830 = vmatpush2.bf16.msra.mxu0 0
  %831 = vmatprep.subr.bf16.mxu0 0
  %832 = vmatpush2.bf16.msra.mxu0 0
  %833 = vmatprep.subr.bf16.mxu0 0
  %834 = vmatpush2.bf16.msra.mxu0 0
  %835 = vmatprep.mubr.bf16.mxu0 0
  %836 = vmatmul.mubr.bf16.gmra.mxu0 %v756
  %v837 = vpop.f32.mrf.mxu0
  %v838 = vadd.f32 %v740, %v837
  %v839 = vpop.f32.mrf.mxu0
  %v840 = vpop.f32.mrf.mxu0
  %v841 = vadd.f32 %v740, %v840
  %v842 = vpop.f32.mrf.mxu0
  %843 = vmatprep.mubr.bf16.mxu0 0
  %844 = vmatmul.mubr.bf16.gmra.mxu0 %v759
  %v845 = vpop.f32.mrf.mxu0
  %v846 = vadd.f32 %v740, %v845
  %v847 = vpop.f32.mrf.mxu0
  %v848 = vpop.f32.mrf.mxu0
  %v849 = vadd.f32 %v740, %v848
  %v850 = vpop.f32.mrf.mxu0
  %851 = vmatprep.mubr.bf16.mxu0 0
  %852 = vmatmul.mubr.bf16.gmra.mxu0 %v762
  %v853 = vpop.f32.mrf.mxu0
  %v854 = vadd.f32 %v740, %v853
  %v855 = vpop.f32.mrf.mxu0
  %v856 = vpop.f32.mrf.mxu0
  %v857 = vadd.f32 %v740, %v856
  %v858 = vpop.f32.mrf.mxu0
  %859 = vmatprep.mubr.bf16.mxu0 0
  %860 = vmatmul.mubr.bf16.gmra.mxu0 %v765
  %v861 = vpop.f32.mrf.mxu0
  %v862 = vadd.f32 %v740, %v861
  %v863 = vpop.f32.mrf.mxu0
  %v864 = vpop.f32.mrf.mxu0
  %v865 = vadd.f32 %v740, %v864
  %v866 = vpop.f32.mrf.mxu0
  %867 = vmatprep.mubr.bf16.mxu0 0
  %868 = vmatmul.mubr.bf16.gmra.mxu0 %v768
  %v869 = vpop.f32.mrf.mxu0
  %v870 = vadd.f32 %v740, %v869
  %v871 = vpop.f32.mrf.mxu0
  %v872 = vpop.f32.mrf.mxu0
  %v873 = vadd.f32 %v740, %v872
  %v874 = vpop.f32.mrf.mxu0
  %875 = vmatprep.mubr.bf16.mxu0 0
  %876 = vmatmul.mubr.bf16.gmra.mxu0 %v771
  %v877 = vpop.f32.mrf.mxu0
  %v878 = vadd.f32 %v740, %v877
  %v879 = vpop.f32.mrf.mxu0
  %v880 = vpop.f32.mrf.mxu0
  %v881 = vadd.f32 %v740, %v880
  %v882 = vpop.f32.mrf.mxu0
  %883 = vmatprep.mubr.bf16.mxu0 0
  %884 = vmatmul.mubr.bf16.gmra.mxu0 %v774
  %v885 = vpop.f32.mrf.mxu0
  %v886 = vadd.f32 %v740, %v885
  %v887 = vpop.f32.mrf.mxu0
  %v888 = vpop.f32.mrf.mxu0
  %v889 = vadd.f32 %v740, %v888
  %v890 = vpop.f32.mrf.mxu0
  %891 = vmatprep.mubr.bf16.mxu0 0
  %892 = vmatmul.mubr.bf16.gmra.mxu0 %v777
  %v893 = vpop.f32.mrf.mxu0
  %v894 = vadd.f32 %v740, %v893
  %v895 = vpop.f32.mrf.mxu0
  %v896 = vpop.f32.mrf.mxu0
  %v897 = vadd.f32 %v740, %v896
  %v898 = vpop.f32.mrf.mxu0
  %899 = vmatprep.mubr.bf16.mxu0 0
  %900 = vmatmul.mubr.bf16.gmra.mxu0 %v780
  %v901 = vpop.f32.mrf.mxu0
  %v902 = vadd.f32 %v740, %v901
  %v903 = vpop.f32.mrf.mxu0
  %v904 = vpop.f32.mrf.mxu0
  %v905 = vadd.f32 %v740, %v904
  %v906 = vpop.f32.mrf.mxu0
  %907 = vmatprep.mubr.bf16.mxu0 0
  %908 = vmatmul.mubr.bf16.gmra.mxu0 %v783
  %v909 = vpop.f32.mrf.mxu0
  %v910 = vadd.f32 %v740, %v909
  %v911 = vpop.f32.mrf.mxu0
  %v912 = vpop.f32.mrf.mxu0
  %v913 = vadd.f32 %v740, %v912
  %v914 = vpop.f32.mrf.mxu0
  %915 = vmatprep.mubr.bf16.mxu0 0
  %916 = vmatmul.mubr.bf16.gmra.mxu0 %v786
  %v917 = vpop.f32.mrf.mxu0
  %v918 = vadd.f32 %v740, %v917
  %v919 = vpop.f32.mrf.mxu0
  %v920 = vpop.f32.mrf.mxu0
  %v921 = vadd.f32 %v740, %v920
  %v922 = vpop.f32.mrf.mxu0
  %923 = vmatprep.mubr.bf16.mxu0 0
  %924 = vmatmul.mubr.bf16.gmra.mxu0 %v789
  %v925 = vpop.f32.mrf.mxu0
  %v926 = vadd.f32 %v740, %v925
  %v927 = vpop.f32.mrf.mxu0
  %v928 = vpop.f32.mrf.mxu0
  %v929 = vadd.f32 %v740, %v928
  %v930 = vpop.f32.mrf.mxu0
  %931 = vmatprep.mubr.bf16.mxu0 0
  %932 = vmatmul.mubr.bf16.gmra.mxu0 %v792
  %v933 = vpop.f32.mrf.mxu0
  %v934 = vadd.f32 %v740, %v933
  %v935 = vpop.f32.mrf.mxu0
  %v936 = vpop.f32.mrf.mxu0
  %v937 = vadd.f32 %v740, %v936
  %v938 = vpop.f32.mrf.mxu0
  %939 = vmatprep.mubr.bf16.mxu0 0
  %940 = vmatmul.mubr.bf16.gmra.mxu0 %v795
  %v941 = vpop.f32.mrf.mxu0
  %v942 = vadd.f32 %v740, %v941
  %v943 = vpop.f32.mrf.mxu0
  %v944 = vpop.f32.mrf.mxu0
  %v945 = vadd.f32 %v740, %v944
  %v946 = vpop.f32.mrf.mxu0
  %947 = vmatprep.mubr.bf16.mxu0 0
  %948 = vmatmul.mubr.bf16.gmra.mxu0 %v798
  %v949 = vpop.f32.mrf.mxu0
  %v950 = vadd.f32 %v740, %v949
  %v951 = vpop.f32.mrf.mxu0
  %v952 = vpop.f32.mrf.mxu0
  %v953 = vadd.f32 %v740, %v952
  %v954 = vpop.f32.mrf.mxu0
  %955 = vmatprep.mubr.bf16.mxu0 0
  %956 = vmatmul.mubr.bf16.gmra.mxu0 %v801
  %v957 = vpop.f32.mrf.mxu0
  %v958 = vadd.f32 %v740, %v957
  %v959 = vpop.f32.mrf.mxu0
  %v960 = vpop.f32.mrf.mxu0
  %v961 = vadd.f32 %v740, %v960
  %v962 = vpop.f32.mrf.mxu0
  %963 = vdwg.mxu0
  %vm964 = vcmask 64512
  %965 = vst.msk [vmem:[%s5] sm:$0xff] %vm964, %v838
  %966 = vst.msk [vmem:[%s5 + $0x8] sm:$0xff] %vm964, %v841
  %967 = vst.msk [vmem:[%s5 + $0x10] sm:$0xff] %vm964, %v846
  %968 = vst.msk [vmem:[%s5 + $0x18] sm:$0xff] %vm964, %v849
  %969 = vst.msk [vmem:[%s5 + $0x20] sm:$0xff] %vm964, %v854
  %970 = vst.msk [vmem:[%s5 + $0x28] sm:$0xff] %vm964, %v857
  %971 = vst.msk [vmem:[%s5 + $0x30] sm:$0xff] %vm964, %v862
  %972 = vst.msk [vmem:[%s5 + $0x38] sm:$0xff] %vm964, %v865
  %973 = vst.msk [vmem:[%s5 + $0x40] sm:$0xff] %vm964, %v870
  %974 = vst.msk [vmem:[%s5 + $0x48] sm:$0xff] %vm964, %v873
  %975 = vst.msk [vmem:[%s5 + $0x50] sm:$0xff] %vm964, %v878
  %976 = vst.msk [vmem:[%s5 + $0x58] sm:$0xff] %vm964, %v881
  %977 = vst.msk [vmem:[%s5 + $0x60] sm:$0xff] %vm964, %v886
  %978 = vst.msk [vmem:[%s5 + $0x68] sm:$0xff] %vm964, %v889
  %979 = vst.msk [vmem:[%s5 + $0x70] sm:$0xff] %vm964, %v894
  %980 = vst.msk [vmem:[%s5 + $0x78] sm:$0xff] %vm964, %v897
  %981 = vst.msk [vmem:[%s5 + $0x80] sm:$0xff] %vm964, %v902
  %982 = vst.msk [vmem:[%s5 + $0x88] sm:$0xff] %vm964, %v905
  %983 = vst.msk [vmem:[%s5 + $0x90] sm:$0xff] %vm964, %v910
  %984 = vst.msk [vmem:[%s5 + $0x98] sm:$0xff] %vm964, %v913
  %985 = vst.msk [vmem:[%s5 + $0xa0] sm:$0xff] %vm964, %v918
  %986 = vst.msk [vmem:[%s5 + $0xa8] sm:$0xff] %vm964, %v921
  %987 = vst.msk [vmem:[%s5 + $0xb0] sm:$0xff] %vm964, %v926
  %988 = vst.msk [vmem:[%s5 + $0xb8] sm:$0xff] %vm964, %v929
  %989 = vst.msk [vmem:[%s5 + $0xc0] sm:$0xff] %vm964, %v934
  %990 = vst.msk [vmem:[%s5 + $0xc8] sm:$0xff] %vm964, %v937
  %991 = vst.msk [vmem:[%s5 + $0xd0] sm:$0xff] %vm964, %v942
  %992 = vst.msk [vmem:[%s5 + $0xd8] sm:$0xff] %vm964, %v945
  %993 = vst.msk [vmem:[%s5 + $0xe0] sm:$0xff] %vm964, %v950
  %994 = vst.msk [vmem:[%s5 + $0xe8] sm:$0xff] %vm964, %v953
  %995 = vst.msk [vmem:[%s5 + $0xf0] sm:$0xff] %vm964, %v958
  %996 = vst.msk [vmem:[%s5 + $0xf8] sm:$0xff] %vm964, %v961
  // Predicated region
  $region22: #{tpu_custom_call.1} parent=0 // pred_check
    _
  $region23: #{tpu_custom_call.1} parent=0 // pred_check_branch
    %998 = sbr.rel (0) target = $region25
  $region24: #{tpu_custom_call.1} parent=0 // pred_region
    _
  $region25: #{tpu_custom_call.1} parent=0 // pred_fallthru
    _
  // Predicated region
  $region26: #{tpu_custom_call.1} parent=0 // pred_check
    _
  $region27: #{tpu_custom_call.1} parent=0 // pred_check_branch
    %1000 = sbr.rel (0) target = $region29
  $region28: #{tpu_custom_call.1} parent=0 // pred_region
    _
  $region29: #{tpu_custom_call.1} parent=0 // pred_fallthru
    _

</llo_original>
